<compile_context>
chip_gen: v7x
topology: tpu7x:2x2x1
jax: 0.10.0
libtpu: 0.0.40
codegen_flags: <defaults>
</compile_context>

<pallas_src>
import jax
import jax.numpy as jnp
from jax.experimental import pallas as pl
from jax.experimental.pallas import tpu as pltpu


def mlp_kernel(x_ref, w1_ref, b1_ref, w2_ref, b2_ref, o_ref):
    # x_ref: (14, TB) stream dtype   w1_ref: (7, 14) stream dtype
    # b1_ref: (7, 1) f32   w2_ref: (7, 1) f32   b2_ref: (1, 1) f32
    # o_ref: (1, TB) f32
    # fc1 + ReLU — MXU matmul with batch on the lane (N) dimension, f32 acc.
    h = jnp.dot(w1_ref[...], x_ref[...], preferred_element_type=jnp.float32)
    h = jnp.maximum(h + b1_ref[...], 0.0)                               # (7, TB)
    # fc2 — tiny (1x7) contraction on VPU (mul) + XLU (sublane sum), not MXU.
    y = jnp.sum(w2_ref[...] * h, axis=0, keepdims=True) + b2_ref[...]   # (1, TB)
    o_ref[...] = jax.nn.sigmoid(y).astype(o_ref.dtype)                  # EUP


def _device_defaults():
    """(default batch tile, dimension_semantics) per TPU generation."""
    try:
        kind = jax.devices()[0].device_kind.lower()
    except Exception:
        kind = ""
    if "v7" in kind:
        # 2 TCs/chip, 64 MiB VMEM/TC (32 MiB scoped default): shard the batch
        # grid axis across cores; tile sized to leave plenty of headroom.
        return 131072, (pltpu.CORE_PARALLEL,)
    if "v5" in kind and ("lite" in kind or "v5e" in kind):
        # Slower HBM + smaller default scoped VMEM: a smaller tile already
        # amortizes the ~0.35 us per-step overhead.
        return 65536, ("parallel",)
    # v6e (and other 128 MiB-VMEM parts).
    return 131072, ("parallel",)


def mlp_forward(x, w1, b1, w2, b2, *, block_b=None, stream_dtype=jnp.bfloat16):
    """x: (B, 14). PyTorch-layout params: w1 (7,14), b1 (7,), w2 (1,7), b2 (1,).
    Returns (B, 1) float32.  `stream_dtype` is the dtype x/W1 are streamed at
    (bf16 halves HBM traffic; pass jnp.float32 for exact f32 parity)."""
    B = x.shape[0]

    default_tb, dim_sems = _device_defaults()
    if block_b is None:
        block_b = default_tb

    # Lane-aligned batch tile (multiple of 128), clamped to the padded batch.
    TB = max(128, min(block_b, 128 * pl.cdiv(B, 128)))
    Bp = pl.cdiv(B, TB) * TB
    grid = (Bp // TB,)

    # Single fused cast + transpose + pad pass (no zero-fill-then-scatter):
    # batch goes onto the lane axis so both the x tiles and the output are
    # lane-dense.
    # TODO(synk): if the upstream producer can emit x as (14, B) directly,
    # drop this pass entirely and stream straight from the producer's buffer.
    xt = jnp.pad(x.astype(stream_dtype).T, ((0, 0), (0, Bp - B)))   # (14, Bp)
    w1k = w1.astype(stream_dtype)                                   # (7, 14)
    b1k = b1.reshape(7, 1).astype(jnp.float32)                      # (7, 1)
    w2k = w2.reshape(7, 1).astype(jnp.float32)                      # (7, 1) = fc2.weight.T
    b2k = b2.reshape(1, 1).astype(jnp.float32)                      # (1, 1)

    itemsize = jnp.dtype(stream_dtype).itemsize
    cost = pl.CostEstimate(
        flops=2 * 14 * 7 * Bp + 2 * 7 * Bp,
        transcendentals=2 * Bp,                       # sigmoid exp + recip
        bytes_accessed=14 * Bp * itemsize + 4 * Bp,   # stream x + write out
    )

    out_t = pl.pallas_call(
        mlp_kernel,
        out_shape=jax.ShapeDtypeStruct((1, Bp), jnp.float32),
        grid=grid,
        in_specs=[
            pl.BlockSpec((14, TB), lambda i: (0, i)),   # x tile, pipelined
            pl.BlockSpec((7, 14), lambda i: (0, 0)),    # weights resident
            pl.BlockSpec((7, 1), lambda i: (0, 0)),
            pl.BlockSpec((7, 1), lambda i: (0, 0)),
            pl.BlockSpec((1, 1), lambda i: (0, 0)),
        ],
        out_specs=pl.BlockSpec((1, TB), lambda i: (0, i)),            # lane-dense
        compiler_params=pltpu.CompilerParams(
            dimension_semantics=dim_sems,
            vmem_limit_bytes=32 << 20,   # explicit: above v5e's 16 MiB default,
                                         # within v7x's 64 MiB physical.
        ),
        cost_estimate=cost,
    )(xt, w1k, b1k, w2k, b2k)

    # Back to PyTorch layout: (1, Bp) -> (B, 1).
    return out_t[:, :B].T


def init_params(key):
    """Deterministic init with PyTorch nn.Linear layouts/shapes."""
    k1, k2, k3, k4 = jax.random.split(key, 4)
    bound1 = 1.0 / jnp.sqrt(14.0)
    bound2 = 1.0 / jnp.sqrt(7.0)
    w1 = jax.random.uniform(k1, (7, 14), jnp.float32, -bound1, bound1)
    b1 = jax.random.uniform(k2, (7,), jnp.float32, -bound1, bound1)
    w2 = jax.random.uniform(k3, (1, 7), jnp.float32, -bound2, bound2)
    b2 = jax.random.uniform(k4, (1,), jnp.float32, -bound2, bound2)
    return w1, b1, w2, b2


if __name__ == "__main__":
    key = jax.random.PRNGKey(0)
    kx, kp = jax.random.split(key)

    B = 8  # small batch (padded to one 128-lane tile inside the wrapper)
    x = jax.random.normal(kx, (B, 14), jnp.float32)
    w1, b1, w2, b2 = init_params(kp)

    # Reference in plain JAX (same math as the PyTorch forward).
    h_ref = jnp.maximum(x @ w1.T + b1, 0.0)
    y_ref = jax.nn.sigmoid(h_ref @ w2.T + b2)

    # Default path: bf16 streaming (HBM-bound op -> ~2x fewer bytes).
    out_bf16 = jax.block_until_ready(mlp_forward(x, w1, b1, w2, b2))
    assert out_bf16.shape == (B, 1)
    assert jnp.allclose(out_bf16, y_ref, atol=5e-3), "bf16-stream mismatch"

    # f32 streaming path: exact parity with the f32 PyTorch reference.
    out_f32 = jax.block_until_ready(
        mlp_forward(x, w1, b1, w2, b2, stream_dtype=jnp.float32))
    assert jnp.allclose(out_f32, y_ref, atol=1e-5, rtol=1e-5), "f32 mismatch"

    print("KERNEL_OK")
</pallas_src>

<mosaic_0001>
module attributes {stable_mosaic.version = 11 : i64} {
  func.func @mlp_kernel(%arg0: i32, %arg1: memref<14x128xbf16, #tpu.memory_space<vmem>>, %arg2: memref<7x14xbf16, #tpu.memory_space<vmem>>, %arg3: memref<7x1xf32, #tpu.memory_space<vmem>>, %arg4: memref<7x1xf32, #tpu.memory_space<vmem>>, %arg5: memref<1x1xf32, #tpu.memory_space<vmem>>, %arg6: memref<1x128xf32, #tpu.memory_space<vmem>>) attributes {dimension_semantics = [#tpu.dimension_semantics<parallel>], iteration_bounds = array<i64: 1>, scalar_prefetch = 0 : i64, scratch_operands = 0 : i64, tpu.core_type = #tpu.core_type<tc>, window_params = [{transform_indices = @transform_0, window_bounds = array<i64: 14, 128>}, {pipeline_mode = #tpu.pipeline_mode<synchronous>, transform_indices = @transform_1, window_bounds = array<i64: 7, 14>}, {pipeline_mode = #tpu.pipeline_mode<synchronous>, transform_indices = @transform_2, window_bounds = array<i64: 7, 1>}, {pipeline_mode = #tpu.pipeline_mode<synchronous>, transform_indices = @transform_3, window_bounds = array<i64: 7, 1>}, {pipeline_mode = #tpu.pipeline_mode<synchronous>, transform_indices = @transform_4, window_bounds = array<i64: 1, 1>}, {transform_indices = @transform_5, window_bounds = array<i64: 1, 128>}]} {
    %c0 = arith.constant 0 : index
    %c0_0 = arith.constant 0 : index
    %0 = vector.load %arg2[%c0, %c0_0] : memref<7x14xbf16, #tpu.memory_space<vmem>>, vector<7x14xbf16>
    %c0_1 = arith.constant 0 : index
    %c0_2 = arith.constant 0 : index
    %1 = vector.load %arg1[%c0_1, %c0_2] : memref<14x128xbf16, #tpu.memory_space<vmem>>, vector<14x128xbf16>
    %cst = arith.constant dense<0.000000e+00> : vector<7x128xf32>
    %2 = tpu.matmul %0, %1, %cst {dimension_numbers = #tpu.dot_dimension_numbers<[1], [0], [0], [1], [0, 0, 1, 1], [], []>} : vector<7x14xbf16>, vector<14x128xbf16>, vector<7x128xf32> -> vector<7x128xf32>
    %c0_3 = arith.constant 0 : index
    %c0_4 = arith.constant 0 : index
    %3 = vector.load %arg3[%c0_3, %c0_4] : memref<7x1xf32, #tpu.memory_space<vmem>>, vector<7x1xf32>
    %4 = vector.broadcast %3 : vector<7x1xf32> to vector<7x128xf32>
    %5 = arith.addf %2, %4 : vector<7x128xf32>
    %cst_5 = arith.constant 0.000000e+00 : f32
    %6 = vector.broadcast %cst_5 : f32 to vector<7x128xf32>
    %7 = arith.maximumf %5, %6 : vector<7x128xf32>
    %c0_6 = arith.constant 0 : index
    %c0_7 = arith.constant 0 : index
    %8 = vector.load %arg4[%c0_6, %c0_7] : memref<7x1xf32, #tpu.memory_space<vmem>>, vector<7x1xf32>
    %9 = vector.broadcast %8 : vector<7x1xf32> to vector<7x128xf32>
    %10 = arith.mulf %9, %7 : vector<7x128xf32>
    %cst_8 = arith.constant dense<0.000000e+00> : vector<128xf32>
    %11 = vector.multi_reduction <add>, %10, %cst_8 [0] : vector<7x128xf32> to vector<128xf32>
    %12 = vector.shape_cast %11 : vector<128xf32> to vector<1x128xf32>
    %c0_9 = arith.constant 0 : index
    %c0_10 = arith.constant 0 : index
    %13 = vector.load %arg5[%c0_9, %c0_10] : memref<1x1xf32, #tpu.memory_space<vmem>>, vector<1x1xf32>
    %14 = vector.broadcast %13 : vector<1x1xf32> to vector<1x128xf32>
    %15 = arith.addf %12, %14 : vector<1x128xf32>
    %16 = arith.negf %15 : vector<1x128xf32>
    %17 = math.exp %16 : vector<1x128xf32>
    %cst_11 = arith.constant 1.000000e+00 : f32
    %18 = vector.broadcast %cst_11 : f32 to vector<1x128xf32>
    %19 = arith.addf %18, %17 : vector<1x128xf32>
    %20 = arith.divf %18, %19 : vector<1x128xf32>
    %c0_12 = arith.constant 0 : index
    %c0_13 = arith.constant 0 : index
    %21 = vector.load %arg6[%c0_12, %c0_13] : memref<1x128xf32, #tpu.memory_space<vmem>>, vector<1x128xf32>
    tpu.vector_store %arg6[%c0_12, %c0_13], %20 {strides = array<i32>} : memref<1x128xf32, #tpu.memory_space<vmem>>, vector<1x128xf32>,
    return
  }
  func.func @transform_0(%arg0: i32) -> (i32, i32) {
    %c0_i32 = arith.constant 0 : i32
    %c0_i32_0 = arith.constant 0 : i32
    return %c0_i32, %arg0 : i32, i32
  }
  func.func @transform_1(%arg0: i32) -> (i32, i32) {
    %c0_i32 = arith.constant 0 : i32
    %c0_i32_0 = arith.constant 0 : i32
    %c0_i32_1 = arith.constant 0 : i32
    return %c0_i32, %c0_i32_0 : i32, i32
  }
  func.func @transform_2(%arg0: i32) -> (i32, i32) {
    %c0_i32 = arith.constant 0 : i32
    %c0_i32_0 = arith.constant 0 : i32
    %c0_i32_1 = arith.constant 0 : i32
    return %c0_i32, %c0_i32_0 : i32, i32
  }
  func.func @transform_3(%arg0: i32) -> (i32, i32) {
    %c0_i32 = arith.constant 0 : i32
    %c0_i32_0 = arith.constant 0 : i32
    %c0_i32_1 = arith.constant 0 : i32
    return %c0_i32, %c0_i32_0 : i32, i32
  }
  func.func @transform_4(%arg0: i32) -> (i32, i32) {
    %c0_i32 = arith.constant 0 : i32
    %c0_i32_0 = arith.constant 0 : i32
    %c0_i32_1 = arith.constant 0 : i32
    return %c0_i32, %c0_i32_0 : i32, i32
  }
  func.func @transform_5(%arg0: i32) -> (i32, i32) {
    %c0_i32 = arith.constant 0 : i32
    %c0_i32_0 = arith.constant 0 : i32
    return %c0_i32, %arg0 : i32, i32
  }
}

</mosaic_0001>

<llo_original>
// kernel: tpu_custom_call.1
$region0: #{tpu_custom_call.1}
  #allocation0 [shape = 'u32[]', space=smem, size = 0x4, offset = 0x4, fixed_abs, tag = 'smem constant byte address 0x4 - core index']
  #allocation1 [shape = 'u32[144,128]{1,0:T(1,128)}', space=vmem, size = 0x12000, scoped, tag = 'internal scratch']
  #allocation2 [shape = 'f32[1,1]{1,0:T(1,128)S(1)}', space=vmem, size = 0x200, scoped, tag = 'scoped memory for tpu_custom_call.1']
  %s0 = inlined_call_operand.vmem [shape: bf16[14,128], index: 0, kind: input, shape index: {}]
  %s1 = inlined_call_operand.vmem [shape: bf16[7,14], index: 1, kind: input, shape index: {}]
  %s2 = inlined_call_operand.vmem [shape: f32[7,1], index: 2, kind: input, shape index: {}]
  %s3 = inlined_call_operand.vmem [shape: f32[7,1], index: 3, kind: input, shape index: {}]
  %s4 = inlined_call_operand.<no memory space> [shape: f32[1,1], index: 4, kind: input, shape index: {}]
  %s5 = inlined_call_operand.hbm [shape: f32[1,128], index: 5, kind: output, shape index: {}]
  %s6 = sld [smem:[#allocation0]]
  $region30: #{tpu_custom_call.1} parent=0
    _
  %s8 = ssub.s32 1, %s6
  %s9 = scalar_select 0, %s8, %s6
  %v10 = vstv %s4
  %11 = vst [vmem:[#allocation2] sm:$0x1] %v10
  $region1: #{tpu_custom_call.1} parent=0
    #allocation3 [shape = 'u8[512]{0}', space=vmem, size = 0x400, scoped, tag = 'output window, operand 0, single buffered']
    #allocation4 [shape = 's32[1]{0}', space=sflag, size = 0x4, scoped, tag = 'scoped memory for tpu_custom_call.1']
    %12 = vsyncpa [#allocation4], 0
    // Predicated region
    $region2: #{tpu_custom_call.1} parent=1 // pred_check
      _
    $region3: #{tpu_custom_call.1} parent=1 // pred_check_branch
      %14 = sbr.rel (0) target = $region5
    $region4: #{tpu_custom_call.1} parent=1 // pred_region
      _
    $region5: #{tpu_custom_call.1} parent=1 // pred_fallthru
      _
    // Predicated region
    $region6: #{tpu_custom_call.1} parent=1 // pred_check
      _
    $region7: #{tpu_custom_call.1} parent=1 // pred_check_branch
      %16 = sbr.rel (0) target = $region9
    $region8: #{tpu_custom_call.1} parent=1 // pred_region
      _
    $region9: #{tpu_custom_call.1} parent=1 // pred_fallthru
      _
    // Predicated region
    $region10: #{tpu_custom_call.1} parent=1 // pred_check
      _
    $region11: #{tpu_custom_call.1} parent=1 // pred_check_branch
      %18 = sbr.rel (0) target = $region13
    $region12: #{tpu_custom_call.1} parent=1 // pred_region
      _
    $region13: #{tpu_custom_call.1} parent=1 // pred_fallthru
      _
    // Predicated region
    $region14: #{tpu_custom_call.1} parent=1 // pred_check
      _
    $region15: #{tpu_custom_call.1} parent=1 // pred_check_branch
      %20 = sbr.rel (0) target = $region17
    $region16: #{tpu_custom_call.1} parent=1 // pred_region
      _
    $region17: #{tpu_custom_call.1} parent=1 // pred_fallthru
      _
    // Predicated region
    $region18: #{tpu_custom_call.1} parent=1 // pred_check
      _
    $region19: #{tpu_custom_call.1} parent=1 // pred_check_branch
      %22 = sbr.rel (0) target = $region21
    $region20: #{tpu_custom_call.1} parent=1 // pred_region
      _
    $region21: #{tpu_custom_call.1} parent=1 // pred_fallthru
      _
    %v24 = vld [vmem:[%s1] sm:$0xf]
    %v25 = vld [vmem:[%s0] sm:$0xf]
    %v26 = vld [vmem:[%s0 + $0x4] sm:$0x7]
    %v27 = vld [vmem:[%s2] sm:$0x7f]
    %29 = vset.pattern.permute.xlu0 0
    %30 = vperm.xlu0 %29, %v27
    %v31 = vpop.permute.xlu0 %30
    %v35 = vunpack.c.l.b16 %v25
    %v36 = vunpack.c.l.b16 %v26
    %v37 = vpack.c.b16 %v36, %v35
    %vm38 = vcmask 113664
    %v40 = vsel %vm38, %v24, 0
    %vm42 = vcmask 1046528
    %v44 = vsel %vm42, %v37, 0
    %46 = vmatprep.subr.bf16.mxu0 0
    %47 = vmatpush1.bf16.msra.mxu0 %v44
    %48 = vmatprep.subr.bf16.mxu0 0
    %49 = vmatpush1.bf16.msra.mxu0 0
    %50 = vmatprep.subr.bf16.mxu0 0
    %51 = vmatpush1.bf16.msra.mxu0 0
    %52 = vmatprep.subr.bf16.mxu0 0
    %53 = vmatpush1.bf16.msra.mxu0 0
    %54 = vmatprep.subr.bf16.mxu0 0
    %55 = vmatpush1.bf16.msra.mxu0 0
    %56 = vmatprep.subr.bf16.mxu0 0
    %57 = vmatpush1.bf16.msra.mxu0 0
    %58 = vmatprep.subr.bf16.mxu0 0
    %59 = vmatpush1.bf16.msra.mxu0 0
    %60 = vmatprep.subr.bf16.mxu0 0
    %61 = vmatpush1.bf16.msra.mxu0 0
    %62 = vmatprep.subr.bf16.mxu0 0
    %63 = vmatpush1.bf16.msra.mxu0 0
    %64 = vmatprep.subr.bf16.mxu0 0
    %65 = vmatpush1.bf16.msra.mxu0 0
    %66 = vmatprep.subr.bf16.mxu0 0
    %67 = vmatpush1.bf16.msra.mxu0 0
    %68 = vmatprep.subr.bf16.mxu0 0
    %69 = vmatpush1.bf16.msra.mxu0 0
    %70 = vmatprep.subr.bf16.mxu0 0
    %71 = vmatpush1.bf16.msra.mxu0 0
    %72 = vmatprep.subr.bf16.mxu0 0
    %73 = vmatpush1.bf16.msra.mxu0 0
    %74 = vmatprep.subr.bf16.mxu0 0
    %75 = vmatpush1.bf16.msra.mxu0 0
    %76 = vmatprep.subr.bf16.mxu0 0
    %77 = vmatpush1.bf16.msra.mxu0 0
    %78 = vmatprep.mubr.bf16.mxu0 0
    %79 = vmatmul.mubr.bf16.gmra.mrb[0].mxu0 %v40
    %v80 = vpop.f32.mrb[0].mxu0
    %v81 = vadd.f32 %v31, %v80
    %v82 = vpop.f32.mrb[0].mxu0
    %v83 = vpop.f32.mrb[0].mxu0
    %v84 = vpop.f32.mrb[0].mxu0
    %85 = vdwg.mxu0
    %v86 = vmax.f32 %v81, 0.0
    %v87 = vld [vmem:[%s3] sm:$0x7f]
    %89 = vset.pattern.permute.xlu0 0
    %90 = vperm.xlu0 %89, %v87
    %v91 = vpop.permute.xlu0 %90
    %v93 = vmul.f32 %v91, %v86
    %v94 = vsel %vm42, %v93, 0.0
    %v95 = vrot.slane %v94, 4
    %v96 = vadd.f32 %v94, %v95
    %v97 = vrot.slane %v96, 2
    %v98 = vadd.f32 %v96, %v97
    %v99 = vrot.slane %v98, 1
    %v100 = vadd.f32 %v98, %v99
    %v101 = vld [vmem:[#allocation2] sm:$0x1]
    %103 = vset.pattern.permute.xlu0 0
    %104 = vperm.xlu0 %103, %v101
    %v105 = vpop.permute.xlu0 %104
    %v107 = vlaneseq
    %v108 = vshrl.u32 %v107, 7
    %v109 = vsub.s32 0, %v108
    %v110 = vrot.slane %v105, %v109
    %v111 = vadd.f32 %v100, %v110
    %v112 = vxor.u32 %v111, 2147483648
    %v113 = vmul.f32 %v112, 1.442695
    %v114 = vpow.pop %v113
    %v115 = vadd.f32 %v114, 1.0
    %v116 = vrcp.pop %v115
    %v117 = vmul.f32 1.0, %v116
    %118 = vst [vmem:[#allocation3] sm:$0x1] %v117
    // Predicated region
    $region22: #{tpu_custom_call.1} parent=1 // pred_check
      _
    $region23: #{tpu_custom_call.1} parent=1 // pred_check_branch
      %120 = sbr.rel (0) target = $region25
    $region24: #{tpu_custom_call.1} parent=1 // pred_region
      %s122 = ssub.s32 16, 16
      %123 = vsyncadd [#allocation4], %s122
      %s125 = sshll.u32 [#allocation3], 4
      %s126 = int_to_ptr.vmem [resolvable:$true] %s125
      %128 = dma.vmem_to_hbm [thread:$0]  %s126, 16, %s5, [#allocation4]
    $region25: #{tpu_custom_call.1} parent=1 // pred_fallthru
      _
    // Predicated region
    $region26: #{tpu_custom_call.1} parent=1 // pred_check
      _
    $region27: #{tpu_custom_call.1} parent=1 // pred_check_branch
      %130 = sbr.rel (0) target = $region29
    $region28: #{tpu_custom_call.1} parent=1 // pred_region
      %131 = dma.done [#allocation4], 16
    $region29: #{tpu_custom_call.1} parent=1 // pred_fallthru
      _
    %132 = vsyncpa [#allocation4], 1

</llo_original>
